<compile_context>
chip_gen: v7x
topology: tpu7x:2x2x1
jax: 0.10.0
libtpu: 0.0.40
codegen_flags: <defaults>
</compile_context>

<pallas_src>
import functools

import jax
import jax.numpy as jnp
from jax.experimental import pallas as pl
from jax.experimental.pallas import tpu as pltpu


def _apply_act(act_id, z, sin_alpha):
    """Activation pool matching MyLinearPool's act_pool indices."""
    if act_id == 0:  # Sine(alpha)
        zz = z if sin_alpha == 1.0 else sin_alpha * z
        return jnp.sin(zz)
    if act_id == 1:  # Tanh
        return jnp.tanh(z)
    if act_id == 2:  # GELU
        # TODO(synk): PyTorch nn.GELU default is exact (erf) GELU; tanh
        # approximation used to stay on ops Mosaic lowers on all chips.
        return jax.nn.gelu(z, approximate=True)
    if act_id == 3:  # SiLU
        return z * jax.nn.sigmoid(z)
    if act_id == 4:  # Softplus (stable form of log(1 + exp(z)))
        return jnp.maximum(z, 0.0) + jnp.log(1.0 + jnp.exp(-jnp.abs(z)))
    raise ValueError(f"unknown activation index {act_id}")


def _linear_pool_kernel(x_ref, w_ref, b_ref, c_ref, s_ref, o_ref, *,
                        act_ids, sin_alpha, scale_identity, share_sigmoid,
                        epi_dtype):
    # x_ref: (TB, Cin) bf16 row tile     w_ref: (Cin, Coutp) bf16 resident W
    # b_ref: (1, Coutp) f32 bias         c_ref: (n_act, Coutp) f32 softmax'd coeff
    # s_ref: (n_act, Coutp) f32 scaler*coeff2 (pre-folded; unused if identity)
    # bf16 x bf16 MXU matmul, f32 accumulation; bias added in f32.
    y = jnp.dot(x_ref[...], w_ref[...],
                preferred_element_type=jnp.float32) + b_ref[...]
    # TODO(synk): use_norm=True (LayerNorm, no affine) branch not implemented;
    # module default is use_norm=False.
    acc = jnp.zeros_like(y)                      # f32 accumulator

    z_shared = y.astype(epi_dtype) if scale_identity else None
    sig_shared = jax.nn.sigmoid(z_shared) if share_sigmoid else None

    for i, aid in enumerate(act_ids):            # static unroll (few activations)
        c = c_ref[i:i + 1, :]                    # (1, Coutp) f32, broadcasts over rows
        if scale_identity:
            z = z_shared                         # skip (scaler*coeff2)*y entirely
        else:
            z = (s_ref[i:i + 1, :] * y).astype(epi_dtype)
        if share_sigmoid and aid == 3:           # SiLU from the shared sigmoid
            a = (z * sig_shared).astype(jnp.float32)
        elif share_sigmoid and aid == 4:         # Softplus(z) = z - log(sigmoid(z))
            zf = z.astype(jnp.float32)
            sp = zf - jnp.log(sig_shared.astype(jnp.float32))
            a = jnp.where(zf < -30.0, 0.0, sp)   # guard sigmoid underflow
        else:
            a = _apply_act(aid, z, sin_alpha).astype(jnp.float32)
        acc = acc + c * a
    o_ref[...] = acc.astype(o_ref.dtype)


def my_linear_pool(x, w, b, coeff, coeff2, *, poolsize=(0, 1, 3, 4),
                   aggregate="softmax", tau=1.0, scaler=1.0, sin_alpha=1.0,
                   epilogue_bf16=None, max_block_rows=1024,
                   vmem_budget_bytes=32 * 1024 * 1024):
    """Fused Linear + activation-pool forward of MyLinearPool.

    x: (B, Cin) f32; w: (Cin, Cout) f32 (== torch fc.weight.T); b: (1, Cout);
    coeff, coeff2: (n_act, Cout). Returns the (B, Cout) pooled output.
    """
    B, Cin = x.shape
    Cout = w.shape[1]
    n_act = len(poolsize)
    assert coeff.shape == (n_act, Cout) and coeff2.shape == (n_act, Cout)

    # ---- coefficient aggregation: tiny (n_act, Cout) transform -> plain jnp ----
    coeff = coeff.astype(jnp.float32)
    if aggregate == "softmax":
        c_agg = jax.nn.softmax(coeff / tau, axis=0)
    elif aggregate == "sigmoid":
        c_agg = jax.nn.sigmoid(coeff)
    elif aggregate == "unlimited":
        c_agg = coeff
    elif aggregate == "l1_norm":
        c_agg = coeff / jnp.sum(jnp.abs(coeff), axis=0)
    else:
        raise NotImplementedError(aggregate)
    c2_scaled = (scaler * coeff2).astype(jnp.float32)

    # Statically detect the common enable_scaling=False case (coeff2 == 1/scaler)
    # so the per-activation pre-scale multiply can be elided in the kernel.
    try:
        scale_identity = bool((c2_scaled == 1.0).all())
    except Exception:                 # traced coeff2 -> keep the multiply
        scale_identity = False
    share_sigmoid = scale_identity and (3 in poolsize) and (4 in poolsize)

    # ---- epilogue precision: bf16 VPU/EUP only exists on v6e / v7x ------------
    if epilogue_bf16 is None:
        kind = jax.devices()[0].device_kind.lower()
        epilogue_bf16 = any(t in kind for t in ("v6", "v7", "7x"))
    epi_dtype = jnp.bfloat16 if epilogue_bf16 else jnp.float32

    # ---- lane-dense output: pad Cout to a multiple of 128 ---------------------
    coutp = ((Cout + 127) // 128) * 128
    if coutp != Cout:
        pad = coutp - Cout
        w = jnp.pad(w, ((0, 0), (0, pad)))
        b = jnp.pad(b, ((0, 0), (0, pad)))
        c_agg = jnp.pad(c_agg, ((0, 0), (0, pad)))
        c2_scaled = jnp.pad(c2_scaled, ((0, 0), (0, pad)), constant_values=1.0)

    # bf16 MXU operands (MXU is bf16-native on v5e/v6e/v7x); halves x/W traffic.
    x_mx = x.astype(jnp.bfloat16)
    w_mx = w.astype(jnp.bfloat16)
    b = b.astype(jnp.float32)

    # ---- row tile from an explicit VMEM budget ---------------------------------
    resident = (Cin * coutp * 2            # W (bf16), single-buffered
                + coutp * 4                # bias
                + 2 * n_act * coutp * 4)   # coeff + scaler*coeff2
    per_row = 2 * Cin * 2 + 2 * coutp * 4  # x bf16 (double-buffered) + out f32 (x2)
    tb = max(8, (vmem_budget_bytes - 2 * resident) // per_row)
    tb = int(min(tb, max_block_rows, B))
    if tb >= 8:
        tb = (tb // 8) * 8
    # v7x has two TensorCores: guarantee >= 2 "parallel" grid steps when B >= 16
    # so both get work (one extra ~0.35us step is noise on single-TC chips).
    if B >= 16 and pl.cdiv(B, tb) < 2:
        tb = ((B + 1) // 2 + 7) // 8 * 8
    grid = (pl.cdiv(B, tb),)
    # TODO(synk): if Cin*coutp bytes approach the budget, add K (Cin) tiling with
    # an f32 accumulator scratch instead of shrinking tb.

    # Explicit scoped-VMEM limit sized to what this call actually needs.
    vmem_needed = 2 * resident + tb * per_row + (2 << 20)
    vmem_limit = int(min(max(vmem_needed, 16 * 1024 * 1024), 56 * 1024 * 1024))

    cost = pl.CostEstimate(
        flops=2 * B * Cin * coutp,
        transcendentals=5 * B * coutp,    # sin/tanh/sigmoid/exp/log pushes per elem
        bytes_accessed=int(x_mx.size) * 2 + int(w_mx.size) * 2 + B * coutp * 4)

    kernel = functools.partial(
        _linear_pool_kernel, act_ids=tuple(poolsize), sin_alpha=sin_alpha,
        scale_identity=scale_identity, share_sigmoid=share_sigmoid,
        epi_dtype=epi_dtype)

    resident_mode = pl.Buffered(1)   # constant-index blocks: no double buffer
    out_p = pl.pallas_call(
        kernel,
        out_shape=jax.ShapeDtypeStruct((B, coutp), x.dtype),
        grid=grid,
        in_specs=[
            pl.BlockSpec((tb, Cin), lambda i: (i, 0)),                 # x row tile
            pl.BlockSpec((Cin, coutp), lambda i: (0, 0),
                         pipeline_mode=resident_mode),                 # W resident
            pl.BlockSpec((1, coutp), lambda i: (0, 0),
                         pipeline_mode=resident_mode),                 # bias
            pl.BlockSpec((n_act, coutp), lambda i: (0, 0),
                         pipeline_mode=resident_mode),                 # coeff
            pl.BlockSpec((n_act, coutp), lambda i: (0, 0),
                         pipeline_mode=resident_mode),                 # scaler*coeff2
        ],
        out_specs=pl.BlockSpec((tb, coutp), lambda i: (i, 0)),
        compiler_params=pltpu.CompilerParams(
            dimension_semantics=("parallel",),
            vmem_limit_bytes=vmem_limit),
        cost_estimate=cost,
    )(x_mx, w_mx, b, c_agg, c2_scaled)

    return out_p[:, :Cout] if coutp != Cout else out_p


if __name__ == "__main__":
    # Small shapes consistent with the module: batch=8, input_channel=32,
    # output_channel=32. poolsize '0,1,3,4' -> Sine, Tanh, SiLU, Softplus.
    # aggregate='softmax' (the module's default 'sum' raises NotImplementedError
    # in its own forward), weight_sharing=True, channel_wise=True, scaler=1.0.
    B, Cin, Cout = 8, 32, 32
    poolsize = (0, 1, 3, 4)
    n_act = len(poolsize)
    tau, scaler, sin_alpha = 1.0, 1.0, 1.0

    key = jax.random.PRNGKey(0)
    kx, kw, kb, kc = jax.random.split(key, 4)
    x = jax.random.normal(kx, (B, Cin), dtype=jnp.float32)
    w = jax.random.normal(kw, (Cin, Cout), dtype=jnp.float32) / (Cin ** 0.5)
    b = 0.1 * jax.random.normal(kb, (1, Cout), dtype=jnp.float32)
    coeff = jax.random.normal(kc, (n_act, Cout), dtype=jnp.float32)  # random_init-style
    coeff2 = jnp.ones((n_act, Cout), dtype=jnp.float32) / scaler

    out = my_linear_pool(x, w, b, coeff, coeff2, poolsize=poolsize,
                         aggregate="softmax", tau=tau, scaler=scaler,
                         sin_alpha=sin_alpha)
    out = jax.block_until_ready(out)
    detach = False
    result = [out, detach]   # out_list=True -> [sum(out), detach]

    # Pure-JAX reference of the same forward (f32 epilogue; matmul operands cast
    # to bf16 exactly like the kernel so the comparison isolates kernel error).
    y_ref = jnp.dot(x.astype(jnp.bfloat16), w.astype(jnp.bfloat16),
                    preferred_element_type=jnp.float32) + b
    c_ref = jax.nn.softmax(coeff / tau, axis=0)
    ref = sum(c_ref[i:i + 1, :]
              * _apply_act(pid, scaler * coeff2[i:i + 1, :] * y_ref, sin_alpha)
              for i, pid in enumerate(poolsize))

    assert out.shape == (B, Cout)
    # 3e-2 tolerance covers the bf16 activation epilogue on v6e/v7x (epilogue is
    # f32 on v5e) plus MXU accumulation-order differences; the PyTorch module
    # itself runs in float64, which the TPU vector units do not support.
    assert jnp.allclose(out, ref, atol=3e-2, rtol=3e-2), "mismatch vs reference"
    print("KERNEL_OK")
</pallas_src>

<mosaic_0001>
module attributes {stable_mosaic.version = 11 : i64} {
  func.func @_linear_pool_kernel(%arg0: i32, %arg1: memref<8x32xbf16, #tpu.memory_space<vmem>>, %arg2: memref<32x128xbf16, #tpu.memory_space<vmem>>, %arg3: memref<1x128xf32, #tpu.memory_space<vmem>>, %arg4: memref<4x128xf32, #tpu.memory_space<vmem>>, %arg5: memref<4x128xf32, #tpu.memory_space<vmem>>, %arg6: memref<8x128xf32, #tpu.memory_space<vmem>>) attributes {dimension_semantics = [#tpu.dimension_semantics<parallel>], iteration_bounds = array<i64: 1>, scalar_prefetch = 0 : i64, scratch_operands = 0 : i64, tpu.core_type = #tpu.core_type<tc>, window_params = [{transform_indices = @transform_0, window_bounds = array<i64: 8, 32>}, {pipeline_mode = #tpu.pipeline_mode<synchronous>, transform_indices = @transform_1, window_bounds = array<i64: 32, 128>}, {pipeline_mode = #tpu.pipeline_mode<synchronous>, transform_indices = @transform_2, window_bounds = array<i64: 1, 128>}, {pipeline_mode = #tpu.pipeline_mode<synchronous>, transform_indices = @transform_3, window_bounds = array<i64: 4, 128>}, {pipeline_mode = #tpu.pipeline_mode<synchronous>, transform_indices = @transform_4, window_bounds = array<i64: 4, 128>}, {transform_indices = @transform_5, window_bounds = array<i64: 8, 128>}]} {
    %c0 = arith.constant 0 : index
    %c0_0 = arith.constant 0 : index
    %0 = vector.load %arg1[%c0, %c0_0] : memref<8x32xbf16, #tpu.memory_space<vmem>>, vector<8x32xbf16>
    %c0_1 = arith.constant 0 : index
    %c0_2 = arith.constant 0 : index
    %1 = vector.load %arg2[%c0_1, %c0_2] : memref<32x128xbf16, #tpu.memory_space<vmem>>, vector<32x128xbf16>
    %cst = arith.constant dense<0.000000e+00> : vector<8x128xf32>
    %2 = tpu.matmul %0, %1, %cst {dimension_numbers = #tpu.dot_dimension_numbers<[1], [0], [0], [1], [0, 0, 1, 1], [], []>} : vector<8x32xbf16>, vector<32x128xbf16>, vector<8x128xf32> -> vector<8x128xf32>
    %c0_3 = arith.constant 0 : index
    %c0_4 = arith.constant 0 : index
    %3 = vector.load %arg3[%c0_3, %c0_4] : memref<1x128xf32, #tpu.memory_space<vmem>>, vector<1x128xf32>
    %4 = vector.broadcast %3 : vector<1x128xf32> to vector<8x128xf32>
    %5 = arith.addf %2, %4 : vector<8x128xf32>
    %cst_5 = arith.constant 0.000000e+00 : f32
    %6 = vector.broadcast %cst_5 : f32 to vector<8x128xf32>
    %7 = arith.negf %5 : vector<8x128xf32>
    %8 = math.exp %7 : vector<8x128xf32>
    %cst_6 = arith.constant 1.000000e+00 : f32
    %9 = vector.broadcast %cst_6 : f32 to vector<8x128xf32>
    %10 = arith.addf %9, %8 : vector<8x128xf32>
    %11 = arith.divf %9, %10 : vector<8x128xf32>
    %c0_7 = arith.constant 0 : index
    %c0_8 = arith.constant 0 : index
    %12 = vector.load %arg4[%c0_7, %c0_8] : memref<4x128xf32, #tpu.memory_space<vmem>>, vector<1x128xf32>
    %13 = math.sin %5 : vector<8x128xf32>
    %14 = vector.broadcast %12 : vector<1x128xf32> to vector<8x128xf32>
    %15 = arith.mulf %14, %13 : vector<8x128xf32>
    %16 = arith.addf %6, %15 : vector<8x128xf32>
    %c1 = arith.constant 1 : index
    %c0_9 = arith.constant 0 : index
    %17 = vector.load %arg4[%c1, %c0_9] : memref<4x128xf32, #tpu.memory_space<vmem>>, vector<1x128xf32>
    %18 = math.tanh %5 : vector<8x128xf32>
    %19 = vector.broadcast %17 : vector<1x128xf32> to vector<8x128xf32>
    %20 = arith.mulf %19, %18 : vector<8x128xf32>
    %21 = arith.addf %16, %20 : vector<8x128xf32>
    %c2 = arith.constant 2 : index
    %c0_10 = arith.constant 0 : index
    %22 = vector.load %arg4[%c2, %c0_10] : memref<4x128xf32, #tpu.memory_space<vmem>>, vector<1x128xf32>
    %23 = arith.mulf %5, %11 : vector<8x128xf32>
    %24 = vector.broadcast %22 : vector<1x128xf32> to vector<8x128xf32>
    %25 = arith.mulf %24, %23 : vector<8x128xf32>
    %26 = arith.addf %21, %25 : vector<8x128xf32>
    %c3 = arith.constant 3 : index
    %c0_11 = arith.constant 0 : index
    %27 = vector.load %arg4[%c3, %c0_11] : memref<4x128xf32, #tpu.memory_space<vmem>>, vector<1x128xf32>
    %28 = math.log %11 : vector<8x128xf32>
    %29 = arith.subf %5, %28 : vector<8x128xf32>
    %cst_12 = arith.constant -3.000000e+01 : f32
    %30 = vector.broadcast %cst_12 : f32 to vector<8x128xf32>
    %31 = arith.cmpf olt, %5, %30 : vector<8x128xf32>
    %cst_13 = arith.constant 0.000000e+00 : f32
    %32 = vector.broadcast %cst_13 : f32 to vector<8x128xf32>
    %33 = arith.select %31, %32, %29 : vector<8x128xi1>, vector<8x128xf32>
    %34 = vector.broadcast %27 : vector<1x128xf32> to vector<8x128xf32>
    %35 = arith.mulf %34, %33 : vector<8x128xf32>
    %36 = arith.addf %26, %35 : vector<8x128xf32>
    %c0_14 = arith.constant 0 : index
    %c0_15 = arith.constant 0 : index
    %37 = vector.load %arg6[%c0_14, %c0_15] : memref<8x128xf32, #tpu.memory_space<vmem>>, vector<8x128xf32>
    tpu.vector_store %arg6[%c0_14, %c0_15], %36 {strides = array<i32>} : memref<8x128xf32, #tpu.memory_space<vmem>>, vector<8x128xf32>,
    return
  }
  func.func @transform_0(%arg0: i32) -> (i32, i32) {
    %c0_i32 = arith.constant 0 : i32
    %c0_i32_0 = arith.constant 0 : i32
    return %arg0, %c0_i32 : i32, i32
  }
  func.func @transform_1(%arg0: i32) -> (i32, i32) {
    %c0_i32 = arith.constant 0 : i32
    %c0_i32_0 = arith.constant 0 : i32
    %c0_i32_1 = arith.constant 0 : i32
    return %c0_i32, %c0_i32_0 : i32, i32
  }
  func.func @transform_2(%arg0: i32) -> (i32, i32) {
    %c0_i32 = arith.constant 0 : i32
    %c0_i32_0 = arith.constant 0 : i32
    %c0_i32_1 = arith.constant 0 : i32
    return %c0_i32, %c0_i32_0 : i32, i32
  }
  func.func @transform_3(%arg0: i32) -> (i32, i32) {
    %c0_i32 = arith.constant 0 : i32
    %c0_i32_0 = arith.constant 0 : i32
    %c0_i32_1 = arith.constant 0 : i32
    return %c0_i32, %c0_i32_0 : i32, i32
  }
  func.func @transform_4(%arg0: i32) -> (i32, i32) {
    %c0_i32 = arith.constant 0 : i32
    %c0_i32_0 = arith.constant 0 : i32
    %c0_i32_1 = arith.constant 0 : i32
    return %c0_i32, %c0_i32_0 : i32, i32
  }
  func.func @transform_5(%arg0: i32) -> (i32, i32) {
    %c0_i32 = arith.constant 0 : i32
    %c0_i32_0 = arith.constant 0 : i32
    return %arg0, %c0_i32 : i32, i32
  }
}

</mosaic_0001>

<llo_original>
// kernel: tpu_custom_call.1
$region0: #{tpu_custom_call.1}
  #allocation0 [shape = 'u32[]', space=smem, size = 0x4, offset = 0x4, fixed_abs, tag = 'smem constant byte address 0x4 - core index']
  #allocation1 [shape = 'u32[144,128]{1,0:T(1,128)}', space=vmem, size = 0x12000, scoped, tag = 'internal scratch']
  %s0 = inlined_call_operand.hbm [shape: bf16[8,32], index: 0, kind: input, shape index: {}]
  %s1 = inlined_call_operand.hbm [shape: bf16[32,128], index: 1, kind: input, shape index: {}]
  %s2 = inlined_call_operand.vmem [shape: f32[1,128], index: 2, kind: input, shape index: {}]
  %s3 = inlined_call_operand.vmem [shape: f32[4,128], index: 3, kind: input, shape index: {}]
  %s4 = inlined_call_operand.vmem [shape: f32[4,128], index: 4, kind: input, shape index: {}]
  %s5 = inlined_call_operand.hbm [shape: f32[8,128], index: 5, kind: output, shape index: {}]
  %s6 = sld [smem:[#allocation0]]
  $region38: #{tpu_custom_call.1} parent=0
    _
  %s8 = ssub.s32 1, %s6
  %s9 = scalar_select 0, %s8, %s6
  $region1: #{tpu_custom_call.1} parent=0
    #allocation2 [shape = 'u8[2048]{0}', space=vmem, size = 0x800, scoped, tag = 'input window, operand 0, single buffered']
    #allocation3 [shape = 's32[1]{0}', space=sflag, size = 0x4, scoped, tag = 'scoped memory for tpu_custom_call.1']
    #allocation4 [shape = 's32[1]{0}', space=sflag, size = 0x4, scoped, tag = 'scoped memory for tpu_custom_call.1']
    #allocation5 [shape = 'u8[8192]{0}', space=vmem, size = 0x2000, scoped, tag = 'input window, operand 1, single buffered']
    #allocation6 [shape = 's32[1]{0}', space=sflag, size = 0x4, scoped, tag = 'scoped memory for tpu_custom_call.1']
    #allocation7 [shape = 'u8[4096]{0}', space=vmem, size = 0x1000, scoped, tag = 'output window, operand 0, single buffered']
    %10 = vsyncpa [#allocation3], 0
    %11 = vsyncpa [#allocation6], 0
    %12 = vsyncpa [#allocation4], 0
    // Predicated region
    $region2: #{tpu_custom_call.1} parent=1 // pred_check
      _
    $region3: #{tpu_custom_call.1} parent=1 // pred_check_branch
      %14 = sbr.rel (0) target = $region5
    $region4: #{tpu_custom_call.1} parent=1 // pred_region
      %s16 = ssub.s32 64, 64
      %17 = vsyncadd [#allocation3], %s16
      %s19 = sshll.u32 [#allocation2], 4
      %s20 = int_to_ptr.vmem [resolvable:$true] %s19
      %22 = dma.hbm_to_vmem [thread:$0]  %s0, 64, %s20, [#allocation3]
    $region5: #{tpu_custom_call.1} parent=1 // pred_fallthru
      _
    // Predicated region
    $region6: #{tpu_custom_call.1} parent=1 // pred_check
      _
    $region7: #{tpu_custom_call.1} parent=1 // pred_check_branch
      %24 = sbr.rel (0) target = $region9
    $region8: #{tpu_custom_call.1} parent=1 // pred_region
      %s26 = ssub.s32 256, 256
      %27 = vsyncadd [#allocation6], %s26
      %s28 = sshll.u32 [#allocation5], 4
      %s29 = int_to_ptr.vmem [resolvable:$true] %s28
      %34 = dma.hbm_to_vmem [thread:$0]  %s1, 256, %s29, [#allocation6], 64, 64, 4
    $region9: #{tpu_custom_call.1} parent=1 // pred_fallthru
      _
    // Predicated region
    $region10: #{tpu_custom_call.1} parent=1 // pred_check
      _
    $region11: #{tpu_custom_call.1} parent=1 // pred_check_branch
      %36 = sbr.rel (0) target = $region13
    $region12: #{tpu_custom_call.1} parent=1 // pred_region
      _
    $region13: #{tpu_custom_call.1} parent=1 // pred_fallthru
      _
    // Predicated region
    $region14: #{tpu_custom_call.1} parent=1 // pred_check
      _
    $region15: #{tpu_custom_call.1} parent=1 // pred_check_branch
      %38 = sbr.rel (0) target = $region17
    $region16: #{tpu_custom_call.1} parent=1 // pred_region
      _
    $region17: #{tpu_custom_call.1} parent=1 // pred_fallthru
      _
    // Predicated region
    $region18: #{tpu_custom_call.1} parent=1 // pred_check
      _
    $region19: #{tpu_custom_call.1} parent=1 // pred_check_branch
      %40 = sbr.rel (0) target = $region21
    $region20: #{tpu_custom_call.1} parent=1 // pred_region
      _
    $region21: #{tpu_custom_call.1} parent=1 // pred_fallthru
      _
    // Predicated region
    $region22: #{tpu_custom_call.1} parent=1 // pred_check
      _
    $region23: #{tpu_custom_call.1} parent=1 // pred_check_branch
      %42 = sbr.rel (0) target = $region25
    $region24: #{tpu_custom_call.1} parent=1 // pred_region
      %43 = dma.done [#allocation3], 64
    $region25: #{tpu_custom_call.1} parent=1 // pred_fallthru
      _
    // Predicated region
    $region26: #{tpu_custom_call.1} parent=1 // pred_check
      _
    $region27: #{tpu_custom_call.1} parent=1 // pred_check_branch
      %45 = sbr.rel (0) target = $region29
    $region28: #{tpu_custom_call.1} parent=1 // pred_region
      %46 = dma.done [#allocation6], 256
    $region29: #{tpu_custom_call.1} parent=1 // pred_fallthru
      _
    %v48 = vld [vmem:[#allocation2] sm:$0xf]
    %v49 = vld [vmem:[#allocation5] sm:$0xf]
    %v50 = vld [vmem:[#allocation5 + $0x4] sm:$0xf]
    %v51 = vld [vmem:[#allocation5 + $0x8] sm:$0xf]
    %v52 = vld [vmem:[#allocation5 + $0xc] sm:$0xf]
    %v53 = vld [vmem:[%s2] sm:$0x1]
    %v55 = vlaneseq
    %v56 = vshrl.u32 %v55, 7
    %v57 = vsub.s32 0, %v56
    %v58 = vrot.slane %v53, %v57
    %v64 = vunpack.c.l.b16 %v49
    %v65 = vunpack.c.l.b16 %v50
    %v66 = vunpack.c.l.b16 %v51
    %v67 = vunpack.c.l.b16 %v52
    %v68 = vpack.c.b16 %v65, %v64
    %v69 = vpack.c.b16 %v67, %v66
    %vm72 = vcmask 261120
    %v74 = vsel %vm72, %v48, 0
    %76 = vmatprep.subr.bf16.mxu0 0
    %77 = vmatpush1.bf16.msra.mxu0 %v68
    %78 = vmatprep.subr.bf16.mxu0 0
    %79 = vmatpush1.bf16.msra.mxu0 %v69
    %80 = vmatprep.subr.bf16.mxu0 0
    %81 = vmatpush1.bf16.msra.mxu0 0
    %82 = vmatprep.subr.bf16.mxu0 0
    %83 = vmatpush1.bf16.msra.mxu0 0
    %84 = vmatprep.subr.bf16.mxu0 0
    %85 = vmatpush1.bf16.msra.mxu0 0
    %86 = vmatprep.subr.bf16.mxu0 0
    %87 = vmatpush1.bf16.msra.mxu0 0
    %88 = vmatprep.subr.bf16.mxu0 0
    %89 = vmatpush1.bf16.msra.mxu0 0
    %90 = vmatprep.subr.bf16.mxu0 0
    %91 = vmatpush1.bf16.msra.mxu0 0
    %92 = vmatprep.subr.bf16.mxu0 0
    %93 = vmatpush1.bf16.msra.mxu0 0
    %94 = vmatprep.subr.bf16.mxu0 0
    %95 = vmatpush1.bf16.msra.mxu0 0
    %96 = vmatprep.subr.bf16.mxu0 0
    %97 = vmatpush1.bf16.msra.mxu0 0
    %98 = vmatprep.subr.bf16.mxu0 0
    %99 = vmatpush1.bf16.msra.mxu0 0
    %100 = vmatprep.subr.bf16.mxu0 0
    %101 = vmatpush1.bf16.msra.mxu0 0
    %102 = vmatprep.subr.bf16.mxu0 0
    %103 = vmatpush1.bf16.msra.mxu0 0
    %104 = vmatprep.subr.bf16.mxu0 0
    %105 = vmatpush1.bf16.msra.mxu0 0
    %106 = vmatprep.subr.bf16.mxu0 0
    %107 = vmatpush1.bf16.msra.mxu0 0
    %108 = vmatprep.mubr.bf16.mxu0 0
    %109 = vmatmul.mubr.bf16.gmra.mrb[0].mxu0 %v74
    %v110 = vpop.f32.mrb[0].mxu0
    %v111 = vadd.f32 %v58, %v110
    %v112 = vpop.f32.mrb[0].mxu0
    %v113 = vpop.f32.mrb[0].mxu0
    %v114 = vpop.f32.mrb[0].mxu0
    %115 = vdwg.mxu0
    %v116 = vxor.u32 %v111, 2147483648
    %v117 = vmul.f32 %v116, 1.442695
    %v118 = vpow.pop %v117
    %v119 = vadd.f32 %v118, 1.0
    %v120 = vrcp.pop %v119
    %v121 = vmul.f32 1.0, %v120
    %v122 = vld [vmem:[%s3] sm:$0x1]
    %v123 = vand.u32 2147483647, %v111
    %vm124 = vcmp.le.f32.partialorder %v123, 0.7853982
    %vm125 = vcmp.lt.s32.totalorder %v111, 0
    %v126 = vand.u32 %v111, 2139095040
    %v127 = vshrl.u32 %v126, 23
    %v128 = vsub.s32 %v127, 127
    %v129 = vand.u32 2147483647, %v111
    %v130 = vand.u32 %v129, 8388607
    %v131 = vor.u32 %v130, 8388608
    %v132 = vsub.s32 0, %v131
    %v133 = vadd.s32 %v128, 1
    %vm134 = vcmp.gt.s32.totalorder %v133, 0
    %v135 = vsel %vm134, %v133, 0
    %v136 = vshrl.u32 %v135, 5
    %v137 = vand.u32 %v135, 31
    %v138 = vsub.s32 32, %v137
    %v139 = vshrl.u32 683565275, %v138
    %v140 = vshll.u32 683565275, %v137
    %v141 = vshrl.u32 2475754826, %v138
    %v142 = vor.u32 %v140, %v141
    %v143 = vshll.u32 2475754826, %v137
    %v144 = vshrl.u32 2131351028, %v138
    %v145 = vor.u32 %v143, %v144
    %v146 = vshll.u32 2131351028, %v137
    %v147 = vshrl.u32 2102212464, %v138
    %v148 = vor.u32 %v146, %v147
    %v149 = vshll.u32 2102212464, %v137
    %v150 = vshrl.u32 920167782, %v138
    %v151 = vor.u32 %v149, %v150
    %v152 = vshll.u32 920167782, %v137
    %v153 = vshrl.u32 1326507024, %v138
    %v154 = vor.u32 %v152, %v153
    %vm155 = vcmp.lt.s32.totalorder %v136, 1
    %vm156 = vcmp.lt.s32.totalorder %v136, 2
    %vm157 = vcmp.lt.s32.totalorder %v136, 3
    %vm158 = vcmp.lt.s32.totalorder %v136, 4
    %v159 = vsel %vm155, %v139, %v142
    %v160 = vsel %vm158, %v148, 2102212464
    %v161 = vsel %vm157, %v145, %v160
    %v162 = vsel %vm156, %v159, %v161
    %v163 = vsel %vm155, %v142, %v145
    %v164 = vsel %vm158, %v151, 920167782
    %v165 = vsel %vm157, %v148, %v164
    %v166 = vsel %vm156, %v163, %v165
    %v167 = vsel %vm155, %v145, %v148
    %v168 = vsel %vm158, %v154, 1326507024
    %v169 = vsel %vm157, %v151, %v168
    %v170 = vsel %vm156, %v167, %v169
    %v171 = vshll.u32 %v131, 8
    %v172 = vmul.u32.u64.compose %v171, %v170
    %v173 = vextract.low.u32 %v172
    %v174 = vextract.high.u32 %v172
    %v175 = vmul.u32.u64.compose %v171, %v166
    %v176 = vextract.low.u32 %v175
    %v177 = vextract.high.u32 %v175
    %v178 = vmul.u32 %v171, %v162
    %v179 = vadd.s32 %v174, %v176
    %vm180 = vc.u32 %v174, %v176
    %v181 = vadd.s32 %v177, 1
    %v182 = vsel %vm180, %v181, %v177
    %v183 = vadd.s32 %v178, %v182
    %v184 = vadd.s32 %v183, 536870912
    %v185 = vshrl.u32 %v184, 30
    %v186 = vshll.u32 %v185, 30
    %v187 = vsub.s32 %v183, %v186
    %vm188 = vcmp.lt.s32.totalorder %v187, 0
    %v189 = vsub.s32 0, %v187
    %v190 = vsel %vm188, %v189, %v187
    %v191 = vclz %v190
    %v192 = vsub.s32 %v191, 2
    %vm193 = vcmp.gt.s32.totalorder 0, %v192
    %v194 = vsel %vm193, 0, %v192
    %v195 = vsub.s32 32, %v194
    %v196 = vshll.u32 %v187, %v194
    %v197 = vshrl.u32 %v179, %v195
    %v198 = vor.u32 %v196, %v197
    %v199 = vsub.s32 4294967266, %v194
    %v200 = vadd.s32 %v199, 127
    %v201 = vshll.u32 %v200, 23
    %v202 = vor.u32 4788187, %v201
    %v203 = vand.u32 2147483647, %v202
    %v205 = vcvt.s32.f32 %v198
    %v206 = vmul.f32 %v205, %v203
    %v207 = vxor.u32 %v206, 2147483648
    %v208 = vsel %vm125, %v207, %v206
    %v209 = vsub.s32 4, %v185
    %v210 = vsel %vm125, %v209, %v185
    %v211 = vsel %vm124, %v111, %v208
    %v212 = vsel %vm124, 0, %v210
    %v213 = vcosq.f32.pop %v211
    %v214 = vsinq.f32.pop %v211
    %vm215 = vweird.f32 %v111
    %v216 = vadd.s32 %v212, 3
    %v217 = vand.u32 %v216, 3
    %vm218 = vcmp.lt.s32.totalorder %v217, 2
    %vm219 = vcmp.eq.s32.totalorder %v217, 0
    %v220 = vxor.u32 %v214, 2147483648
    %v221 = vsel %vm219, %v213, %v220
    %vm222 = vcmp.eq.s32.totalorder %v217, 2
    %v223 = vxor.u32 %v213, 2147483648
    %v224 = vsel %vm222, %v223, %v214
    %v225 = vsel %vm218, %v221, %v224
    %v226 = vsel %vm215, nan, %v225
    %v227 = vlaneseq
    %v228 = vshrl.u32 %v227, 7
    %v229 = vsub.s32 0, %v228
    %v230 = vrot.slane %v122, %v229
    %v231 = vmul.f32 %v230, %v226
    %v232 = vadd.f32 %v231, 0.0
    %v233 = vld [vmem:[%s3 + $0x1] sm:$0x1]
    %v234 = vtanh.pop %v111
    %v235 = vlaneseq
    %v236 = vshrl.u32 %v235, 7
    %v237 = vsub.s32 0, %v236
    %v238 = vrot.slane %v233, %v237
    %v239 = vmul.f32 %v238, %v234
    %v240 = vadd.f32 %v232, %v239
    %v241 = vld [vmem:[%s3 + $0x2] sm:$0x1]
    %v242 = vmul.f32 %v111, %v121
    %v243 = vlaneseq
    %v244 = vshrl.u32 %v243, 7
    %v245 = vsub.s32 0, %v244
    %v246 = vrot.slane %v241, %v245
    %v247 = vmul.f32 %v246, %v242
    %v248 = vadd.f32 %v240, %v247
    %v249 = vld [vmem:[%s3 + $0x3] sm:$0x1]
    %v250 = vlog2.pop %v121
    %v251 = vmul.f32 %v250, 0.6931472
    %v252 = vsub.f32 %v111, %v251
    %vm253 = vcmp.lt.f32.partialorder %v111, -30.0
    %v254 = vsel %vm253, 0.0, %v252
    %v255 = vlaneseq
    %v256 = vshrl.u32 %v255, 7
    %v257 = vsub.s32 0, %v256
    %v258 = vrot.slane %v249, %v257
    %v259 = vmul.f32 %v258, %v254
    %v260 = vadd.f32 %v248, %v259
    %261 = vst [vmem:[#allocation7] sm:$0xff] %v260
    // Predicated region
    $region30: #{tpu_custom_call.1} parent=1 // pred_check
      _
    $region31: #{tpu_custom_call.1} parent=1 // pred_check_branch
      %263 = sbr.rel (0) target = $region33
    $region32: #{tpu_custom_call.1} parent=1 // pred_region
      %s265 = ssub.s32 128, 128
      %266 = vsyncadd [#allocation4], %s265
      %s268 = sshll.u32 [#allocation7], 4
      %s269 = int_to_ptr.vmem [resolvable:$true] %s268
      %271 = dma.vmem_to_hbm [thread:$0]  %s269, 128, %s5, [#allocation4]
    $region33: #{tpu_custom_call.1} parent=1 // pred_fallthru
      _
    // Predicated region
    $region34: #{tpu_custom_call.1} parent=1 // pred_check
      _
    $region35: #{tpu_custom_call.1} parent=1 // pred_check_branch
      %273 = sbr.rel (0) target = $region37
    $region36: #{tpu_custom_call.1} parent=1 // pred_region
      %274 = dma.done [#allocation4], 128
    $region37: #{tpu_custom_call.1} parent=1 // pred_fallthru
      _
    %275 = vsyncpa [#allocation3], 1
    %276 = vsyncpa [#allocation6], 1
    %277 = vsyncpa [#allocation4], 1

</llo_original>
